<compile_context>
chip_gen: v7x
topology: tpu7x:2x2x1
jax: 0.10.0
libtpu: 0.0.40
codegen_flags: <defaults>
</compile_context>

<pallas_src>
import functools

import jax
import jax.numpy as jnp
from jax.experimental import pallas as pl
from jax.experimental.pallas import tpu as pltpu

BN_EPS = 1e-5
LANE = 128  # output column tile (lane-dense)


def _ffblock_kernel(x_ref, gamma_ref, w_ref, bp_ref, o_ref, *, batch_norm):
    """One F_out column tile; whole batch resident (BN stats are whole-batch)."""
    x = x_ref[...].astype(jnp.float32)                       # [N, F_in]

    if batch_norm:
        # ---- BatchNorm1d (training-mode forward: batch stats, biased variance) ----
        mean = jnp.mean(x, axis=0, keepdims=True)             # [1, F_in]
        centered = x - mean
        var = jnp.mean(centered * centered, axis=0, keepdims=True)
        # Folded affine: one per-feature scale, beta is already folded into bp_ref.
        scale = gamma_ref[...] * jax.lax.rsqrt(var + BN_EPS)  # [1, F_in]
        xn = centered * scale                                 # single [N,F_in] VPU mul
    else:
        xn = x

    # ---- Linear (bf16 MXU operands, f32 accumulation) ----
    y = jnp.dot(xn.astype(jnp.bfloat16), w_ref[...],
                preferred_element_type=jnp.float32)           # [N, TN]
    y = y + bp_ref[...]                                       # b' = beta @ W + b (prefolded)

    # ---- Dropout (inference: identity) + ReLU; lane-dense (TN multiple of 128) store ----
    o_ref[...] = jnp.maximum(y, 0.0).astype(o_ref.dtype)


def feed_forward_block(x, gamma, beta, w, b, *, batch_norm=True):
    """x: [N, F_in] f32; gamma/beta: [1, F_in]; w: [F_in, F_out]; b: [1, F_out]."""
    n, f_in = x.shape
    f_out = w.shape[1]

    # Fold the BN shift through the linear layer: beta @ W + b (constant, XLA folds it).
    if batch_norm:
        b_prime = beta.astype(jnp.float32) @ w.astype(jnp.float32) + b.astype(jnp.float32)
    else:
        b_prime = b.astype(jnp.float32)

    # Pad F_out up to a multiple of 128 so the kernel's output stores are unmasked vst.
    f_pad = ((f_out + LANE - 1) // LANE) * LANE
    pad = f_pad - f_out
    w_p = jnp.pad(w, ((0, 0), (0, pad))).astype(jnp.bfloat16)   # bf16 weights in HBM
    bp_p = jnp.pad(b_prime, ((0, 0), (0, pad)))                 # f32 bias

    grid = (f_pad // LANE,)
    kernel = functools.partial(_ffblock_kernel, batch_norm=batch_norm)

    out_padded = pl.pallas_call(
        kernel,
        out_shape=jax.ShapeDtypeStruct((n, f_pad), x.dtype),
        grid=grid,
        in_specs=[
            pl.BlockSpec((n, f_in), lambda j: (0, 0)),      # x: whole batch every step
            pl.BlockSpec((1, f_in), lambda j: (0, 0)),      # gamma
            pl.BlockSpec((f_in, LANE), lambda j: (0, j)),   # W column tile (bf16)
            pl.BlockSpec((1, LANE), lambda j: (0, j)),      # folded bias tile
        ],
        out_specs=pl.BlockSpec((n, LANE), lambda j: (0, j)),
        compiler_params=pltpu.CompilerParams(
            dimension_semantics=("parallel",),
        ),
    )(x, gamma, w_p, bp_p)

    return out_padded[:, :f_out]


def _reference(x, gamma, beta, w, b, *, batch_norm=True):
    if batch_norm:
        mean = jnp.mean(x, axis=0, keepdims=True)
        var = jnp.mean((x - mean) ** 2, axis=0, keepdims=True)
        xn = (x - mean) / jnp.sqrt(var + BN_EPS) * gamma + beta
    else:
        xn = x
    return jnp.maximum(xn @ w + b, 0.0)


if __name__ == "__main__":
    # Small shapes implied by the module: batch=8, in_features=32, out_features=64.
    N, F_IN, F_OUT = 8, 32, 64
    key = jax.random.PRNGKey(0)
    kx, kw, kb = jax.random.split(key, 3)

    x = jax.random.normal(kx, (N, F_IN), dtype=jnp.float32)

    # Deterministic parameter init (mimics PyTorch defaults):
    #   BatchNorm1d: gamma=1, beta=0
    #   Linear: U(-1/sqrt(F_IN), 1/sqrt(F_IN)) for weight and bias
    gamma = jnp.ones((1, F_IN), dtype=jnp.float32)
    beta = jnp.zeros((1, F_IN), dtype=jnp.float32)
    bound = 1.0 / (F_IN ** 0.5)
    w = jax.random.uniform(kw, (F_IN, F_OUT), minval=-bound, maxval=bound,
                           dtype=jnp.float32)
    b = jax.random.uniform(kb, (1, F_OUT), minval=-bound, maxval=bound,
                           dtype=jnp.float32)

    out = feed_forward_block(x, gamma, beta, w, b, batch_norm=True)
    out = jax.block_until_ready(out)

    ref = _reference(x, gamma, beta, w, b, batch_norm=True)
    assert out.shape == (N, F_OUT)
    # Matmul operands are bf16 (MXU dtype win); compare against the f32 reference with a
    # tolerance that covers bf16 rounding over the K=32 reduction.
    assert jnp.allclose(out, ref, atol=1e-2, rtol=1e-2), "mismatch vs reference"

    print("KERNEL_OK")
</pallas_src>

<mosaic_0001>
module attributes {stable_mosaic.version = 11 : i64} {
  func.func @_ffblock_kernel(%arg0: i32, %arg1: memref<8x32xf32, #tpu.memory_space<vmem>>, %arg2: memref<1x32xf32, #tpu.memory_space<vmem>>, %arg3: memref<32x128xbf16, #tpu.memory_space<vmem>>, %arg4: memref<1x128xf32, #tpu.memory_space<vmem>>, %arg5: memref<8x128xf32, #tpu.memory_space<vmem>>) attributes {dimension_semantics = [#tpu.dimension_semantics<parallel>], iteration_bounds = array<i64: 1>, scalar_prefetch = 0 : i64, scratch_operands = 0 : i64, tpu.core_type = #tpu.core_type<tc>, window_params = [{pipeline_mode = #tpu.pipeline_mode<synchronous>, transform_indices = @transform_0, window_bounds = array<i64: 8, 32>}, {pipeline_mode = #tpu.pipeline_mode<synchronous>, transform_indices = @transform_1, window_bounds = array<i64: 1, 32>}, {transform_indices = @transform_2, window_bounds = array<i64: 32, 128>}, {transform_indices = @transform_3, window_bounds = array<i64: 1, 128>}, {transform_indices = @transform_4, window_bounds = array<i64: 8, 128>}]} {
    %c0 = arith.constant 0 : index
    %c0_0 = arith.constant 0 : index
    %0 = vector.load %arg1[%c0, %c0_0] : memref<8x32xf32, #tpu.memory_space<vmem>>, vector<8x32xf32>
    %cst = arith.constant dense<0.000000e+00> : vector<32xf32>
    %1 = vector.multi_reduction <add>, %0, %cst [0] : vector<8x32xf32> to vector<32xf32>
    %2 = vector.shape_cast %1 : vector<32xf32> to vector<1x32xf32>
    %cst_1 = arith.constant 8.000000e+00 : f32
    %3 = vector.broadcast %cst_1 : f32 to vector<1x32xf32>
    %4 = arith.divf %2, %3 : vector<1x32xf32>
    %5 = vector.broadcast %4 : vector<1x32xf32> to vector<8x32xf32>
    %6 = arith.subf %0, %5 : vector<8x32xf32>
    %7 = arith.mulf %6, %6 : vector<8x32xf32>
    %cst_2 = arith.constant dense<0.000000e+00> : vector<32xf32>
    %8 = vector.multi_reduction <add>, %7, %cst_2 [0] : vector<8x32xf32> to vector<32xf32>
    %9 = vector.shape_cast %8 : vector<32xf32> to vector<1x32xf32>
    %cst_3 = arith.constant 8.000000e+00 : f32
    %10 = vector.broadcast %cst_3 : f32 to vector<1x32xf32>
    %11 = arith.divf %9, %10 : vector<1x32xf32>
    %c0_4 = arith.constant 0 : index
    %c0_5 = arith.constant 0 : index
    %12 = vector.load %arg2[%c0_4, %c0_5] : memref<1x32xf32, #tpu.memory_space<vmem>>, vector<1x32xf32>
    %cst_6 = arith.constant 9.99999974E-6 : f32
    %13 = vector.broadcast %cst_6 : f32 to vector<1x32xf32>
    %14 = arith.addf %11, %13 : vector<1x32xf32>
    %15 = math.rsqrt %14 : vector<1x32xf32>
    %16 = arith.mulf %12, %15 : vector<1x32xf32>
    %17 = vector.broadcast %16 : vector<1x32xf32> to vector<8x32xf32>
    %18 = arith.mulf %6, %17 : vector<8x32xf32>
    %19 = arith.truncf %18 : vector<8x32xf32> to vector<8x32xbf16>
    %c0_7 = arith.constant 0 : index
    %c0_8 = arith.constant 0 : index
    %20 = vector.load %arg3[%c0_7, %c0_8] : memref<32x128xbf16, #tpu.memory_space<vmem>>, vector<32x128xbf16>
    %cst_9 = arith.constant dense<0.000000e+00> : vector<8x128xf32>
    %21 = tpu.matmul %19, %20, %cst_9 {dimension_numbers = #tpu.dot_dimension_numbers<[1], [0], [0], [1], [0, 0, 1, 1], [], []>} : vector<8x32xbf16>, vector<32x128xbf16>, vector<8x128xf32> -> vector<8x128xf32>
    %c0_10 = arith.constant 0 : index
    %c0_11 = arith.constant 0 : index
    %22 = vector.load %arg4[%c0_10, %c0_11] : memref<1x128xf32, #tpu.memory_space<vmem>>, vector<1x128xf32>
    %23 = vector.broadcast %22 : vector<1x128xf32> to vector<8x128xf32>
    %24 = arith.addf %21, %23 : vector<8x128xf32>
    %cst_12 = arith.constant 0.000000e+00 : f32
    %25 = vector.broadcast %cst_12 : f32 to vector<8x128xf32>
    %26 = arith.maximumf %24, %25 : vector<8x128xf32>
    %c0_13 = arith.constant 0 : index
    %c0_14 = arith.constant 0 : index
    %27 = vector.load %arg5[%c0_13, %c0_14] : memref<8x128xf32, #tpu.memory_space<vmem>>, vector<8x128xf32>
    tpu.vector_store %arg5[%c0_13, %c0_14], %26 {strides = array<i32>} : memref<8x128xf32, #tpu.memory_space<vmem>>, vector<8x128xf32>,
    return
  }
  func.func @transform_0(%arg0: i32) -> (i32, i32) {
    %c0_i32 = arith.constant 0 : i32
    %c0_i32_0 = arith.constant 0 : i32
    %c0_i32_1 = arith.constant 0 : i32
    return %c0_i32, %c0_i32_0 : i32, i32
  }
  func.func @transform_1(%arg0: i32) -> (i32, i32) {
    %c0_i32 = arith.constant 0 : i32
    %c0_i32_0 = arith.constant 0 : i32
    %c0_i32_1 = arith.constant 0 : i32
    return %c0_i32, %c0_i32_0 : i32, i32
  }
  func.func @transform_2(%arg0: i32) -> (i32, i32) {
    %c0_i32 = arith.constant 0 : i32
    %c0_i32_0 = arith.constant 0 : i32
    return %c0_i32, %arg0 : i32, i32
  }
  func.func @transform_3(%arg0: i32) -> (i32, i32) {
    %c0_i32 = arith.constant 0 : i32
    %c0_i32_0 = arith.constant 0 : i32
    return %c0_i32, %arg0 : i32, i32
  }
  func.func @transform_4(%arg0: i32) -> (i32, i32) {
    %c0_i32 = arith.constant 0 : i32
    %c0_i32_0 = arith.constant 0 : i32
    return %c0_i32, %arg0 : i32, i32
  }
}

</mosaic_0001>

<llo_original>
// kernel: tpu_custom_call.1
$region0: #{tpu_custom_call.1}
  #allocation0 [shape = 'u32[]', space=smem, size = 0x4, offset = 0x4, fixed_abs, tag = 'smem constant byte address 0x4 - core index']
  #allocation1 [shape = 'u32[144,128]{1,0:T(1,128)}', space=vmem, size = 0x12000, scoped, tag = 'internal scratch']
  %s0 = inlined_call_operand.hbm [shape: f32[8,32], index: 0, kind: input, shape index: {}]
  %s1 = inlined_call_operand.vmem [shape: f32[1,32], index: 1, kind: input, shape index: {}]
  %s2 = inlined_call_operand.hbm [shape: bf16[32,128], index: 2, kind: input, shape index: {}]
  %s3 = inlined_call_operand.vmem [shape: f32[1,128], index: 3, kind: input, shape index: {}]
  %s4 = inlined_call_operand.hbm [shape: f32[8,128], index: 4, kind: output, shape index: {}]
  %s5 = sld [smem:[#allocation0]]
  $region34: #{tpu_custom_call.1} parent=0
    _
  %s7 = ssub.s32 1, %s5
  %s8 = scalar_select 0, %s7, %s5
  $region1: #{tpu_custom_call.1} parent=0
    #allocation2 [shape = 'u8[4096]{0}', space=vmem, size = 0x1000, scoped, tag = 'input window, operand 0, single buffered']
    #allocation3 [shape = 's32[1]{0}', space=sflag, size = 0x4, scoped, tag = 'scoped memory for tpu_custom_call.1']
    #allocation4 [shape = 's32[1]{0}', space=sflag, size = 0x4, scoped, tag = 'scoped memory for tpu_custom_call.1']
    #allocation5 [shape = 'u8[8192]{0}', space=vmem, size = 0x2000, scoped, tag = 'input window, operand 2, single buffered']
    #allocation6 [shape = 's32[1]{0}', space=sflag, size = 0x4, scoped, tag = 'scoped memory for tpu_custom_call.1']
    #allocation7 [shape = 'u8[4096]{0}', space=vmem, size = 0x1000, scoped, tag = 'output window, operand 0, single buffered']
    %9 = vsyncpa [#allocation3], 0
    %10 = vsyncpa [#allocation6], 0
    %11 = vsyncpa [#allocation4], 0
    // Predicated region
    $region2: #{tpu_custom_call.1} parent=1 // pred_check
      _
    $region3: #{tpu_custom_call.1} parent=1 // pred_check_branch
      %13 = sbr.rel (0) target = $region5
    $region4: #{tpu_custom_call.1} parent=1 // pred_region
      %s15 = ssub.s32 128, 128
      %16 = vsyncadd [#allocation3], %s15
      %s18 = sshll.u32 [#allocation2], 4
      %s19 = int_to_ptr.vmem [resolvable:$true] %s18
      %21 = dma.hbm_to_vmem [thread:$0]  %s0, 128, %s19, [#allocation3]
    $region5: #{tpu_custom_call.1} parent=1 // pred_fallthru
      _
    // Predicated region
    $region6: #{tpu_custom_call.1} parent=1 // pred_check
      _
    $region7: #{tpu_custom_call.1} parent=1 // pred_check_branch
      %23 = sbr.rel (0) target = $region9
    $region8: #{tpu_custom_call.1} parent=1 // pred_region
      _
    $region9: #{tpu_custom_call.1} parent=1 // pred_fallthru
      _
    // Predicated region
    $region10: #{tpu_custom_call.1} parent=1 // pred_check
      _
    $region11: #{tpu_custom_call.1} parent=1 // pred_check_branch
      %25 = sbr.rel (0) target = $region13
    $region12: #{tpu_custom_call.1} parent=1 // pred_region
      %s27 = ssub.s32 256, 256
      %28 = vsyncadd [#allocation6], %s27
      %s29 = sshll.u32 [#allocation5], 4
      %s30 = int_to_ptr.vmem [resolvable:$true] %s29
      %35 = dma.hbm_to_vmem [thread:$0]  %s2, 256, %s30, [#allocation6], 64, 64, 4
    $region13: #{tpu_custom_call.1} parent=1 // pred_fallthru
      _
    // Predicated region
    $region14: #{tpu_custom_call.1} parent=1 // pred_check
      _
    $region15: #{tpu_custom_call.1} parent=1 // pred_check_branch
      %37 = sbr.rel (0) target = $region17
    $region16: #{tpu_custom_call.1} parent=1 // pred_region
      _
    $region17: #{tpu_custom_call.1} parent=1 // pred_fallthru
      _
    // Predicated region
    $region18: #{tpu_custom_call.1} parent=1 // pred_check
      _
    $region19: #{tpu_custom_call.1} parent=1 // pred_check_branch
      %39 = sbr.rel (0) target = $region21
    $region20: #{tpu_custom_call.1} parent=1 // pred_region
      %40 = dma.done [#allocation3], 128
    $region21: #{tpu_custom_call.1} parent=1 // pred_fallthru
      _
    // Predicated region
    $region22: #{tpu_custom_call.1} parent=1 // pred_check
      _
    $region23: #{tpu_custom_call.1} parent=1 // pred_check_branch
      %42 = sbr.rel (0) target = $region25
    $region24: #{tpu_custom_call.1} parent=1 // pred_region
      %43 = dma.done [#allocation6], 256
    $region25: #{tpu_custom_call.1} parent=1 // pred_fallthru
      _
    %v45 = vld [vmem:[#allocation2] sm:$0xff]
    %vm46 = vcmask 261120
    %v47 = vsel %vm46, %v45, 0.0
    %v48 = vrot.slane %v47, 4
    %v49 = vadd.f32 %v47, %v48
    %v50 = vrot.slane %v49, 2
    %v51 = vadd.f32 %v49, %v50
    %v52 = vrot.slane %v51, 1
    %v53 = vadd.f32 %v51, %v52
    %v54 = vrcp.pop 8.0
    %v55 = vmul.f32 %v53, %v54
    %v56 = vsub.f32 %v45, %v55
    %v57 = vmul.f32 %v56, %v56
    %v58 = vsel %vm46, %v57, 0.0
    %v59 = vrot.slane %v58, 4
    %v60 = vadd.f32 %v58, %v59
    %v61 = vrot.slane %v60, 2
    %v62 = vadd.f32 %v60, %v61
    %v63 = vrot.slane %v62, 1
    %v64 = vadd.f32 %v62, %v63
    %v65 = vmul.f32 %v64, %v54
    %v66 = vld [vmem:[%s1] sm:$0x1]
    %v67 = vadd.f32 %v65, 1e-05
    %v68 = vrsqrt.pop %v67
    %v69 = vmul.f32 %v66, %v68
    %v71 = vlaneseq
    %v72 = vshrl.u32 %v71, 7
    %v73 = vsub.s32 0, %v72
    %v74 = vrot.slane %v69, %v73
    %v76 = vmul.f32 %v56, %v74
    %v77 = vpack.c.bf16 %v76, %v76
    %v78 = vld [vmem:[#allocation5] sm:$0xf]
    %v79 = vld [vmem:[#allocation5 + $0x4] sm:$0xf]
    %v80 = vld [vmem:[#allocation5 + $0x8] sm:$0xf]
    %v81 = vld [vmem:[#allocation5 + $0xc] sm:$0xf]
    %v82 = vld [vmem:[%s3] sm:$0x1]
    %v84 = vlaneseq
    %v85 = vshrl.u32 %v84, 7
    %v86 = vsub.s32 0, %v85
    %v87 = vrot.slane %v82, %v86
    %v93 = vunpack.c.l.b16 %v78
    %v94 = vunpack.c.l.b16 %v79
    %v95 = vunpack.c.l.b16 %v80
    %v96 = vunpack.c.l.b16 %v81
    %v97 = vpack.c.b16 %v94, %v93
    %v98 = vpack.c.b16 %v96, %v95
    %v102 = vsel %vm46, %v77, 0
    %104 = vmatprep.subr.bf16.mxu0 0
    %105 = vmatpush1.bf16.msra.mxu0 %v97
    %106 = vmatprep.subr.bf16.mxu0 0
    %107 = vmatpush1.bf16.msra.mxu0 %v98
    %108 = vmatprep.subr.bf16.mxu0 0
    %109 = vmatpush1.bf16.msra.mxu0 0
    %110 = vmatprep.subr.bf16.mxu0 0
    %111 = vmatpush1.bf16.msra.mxu0 0
    %112 = vmatprep.subr.bf16.mxu0 0
    %113 = vmatpush1.bf16.msra.mxu0 0
    %114 = vmatprep.subr.bf16.mxu0 0
    %115 = vmatpush1.bf16.msra.mxu0 0
    %116 = vmatprep.subr.bf16.mxu0 0
    %117 = vmatpush1.bf16.msra.mxu0 0
    %118 = vmatprep.subr.bf16.mxu0 0
    %119 = vmatpush1.bf16.msra.mxu0 0
    %120 = vmatprep.subr.bf16.mxu0 0
    %121 = vmatpush1.bf16.msra.mxu0 0
    %122 = vmatprep.subr.bf16.mxu0 0
    %123 = vmatpush1.bf16.msra.mxu0 0
    %124 = vmatprep.subr.bf16.mxu0 0
    %125 = vmatpush1.bf16.msra.mxu0 0
    %126 = vmatprep.subr.bf16.mxu0 0
    %127 = vmatpush1.bf16.msra.mxu0 0
    %128 = vmatprep.subr.bf16.mxu0 0
    %129 = vmatpush1.bf16.msra.mxu0 0
    %130 = vmatprep.subr.bf16.mxu0 0
    %131 = vmatpush1.bf16.msra.mxu0 0
    %132 = vmatprep.subr.bf16.mxu0 0
    %133 = vmatpush1.bf16.msra.mxu0 0
    %134 = vmatprep.subr.bf16.mxu0 0
    %135 = vmatpush1.bf16.msra.mxu0 0
    %136 = vmatprep.mubr.bf16.mxu0 0
    %137 = vmatmul.mubr.bf16.gmra.mrb[0].mxu0 %v102
    %v138 = vpop.f32.mrb[0].mxu0
    %v139 = vadd.f32 %v87, %v138
    %v140 = vpop.f32.mrb[0].mxu0
    %v141 = vpop.f32.mrb[0].mxu0
    %v142 = vpop.f32.mrb[0].mxu0
    %143 = vdwg.mxu0
    %v144 = vmax.f32 %v139, 0.0
    %145 = vst [vmem:[#allocation7] sm:$0xff] %v144
    // Predicated region
    $region26: #{tpu_custom_call.1} parent=1 // pred_check
      _
    $region27: #{tpu_custom_call.1} parent=1 // pred_check_branch
      %147 = sbr.rel (0) target = $region29
    $region28: #{tpu_custom_call.1} parent=1 // pred_region
      %s149 = ssub.s32 128, 128
      %150 = vsyncadd [#allocation4], %s149
      %s152 = sshll.u32 [#allocation7], 4
      %s153 = int_to_ptr.vmem [resolvable:$true] %s152
      %155 = dma.vmem_to_hbm [thread:$0]  %s153, 128, %s4, [#allocation4]
    $region29: #{tpu_custom_call.1} parent=1 // pred_fallthru
      _
    // Predicated region
    $region30: #{tpu_custom_call.1} parent=1 // pred_check
      _
    $region31: #{tpu_custom_call.1} parent=1 // pred_check_branch
      %157 = sbr.rel (0) target = $region33
    $region32: #{tpu_custom_call.1} parent=1 // pred_region
      %158 = dma.done [#allocation4], 128
    $region33: #{tpu_custom_call.1} parent=1 // pred_fallthru
      _
    %159 = vsyncpa [#allocation3], 1
    %160 = vsyncpa [#allocation6], 1
    %161 = vsyncpa [#allocation4], 1

</llo_original>
